<compile_context>
chip_gen: v7x
topology: tpu7x:2x2x1
jax: 0.10.0
libtpu: 0.0.40
codegen_flags: <defaults>
</compile_context>

<pallas_src>
import functools

import jax
import jax.numpy as jnp
from jax.experimental import pallas as pl
from jax.experimental.pallas import tpu as pltpu


def _mlp_kernel(x_ref, w1_ref, b1_ref, w2_ref, b2_ref, w3_ref, b3_ref, o_ref):
    # Layer 1: Linear + ReLU  (bf16 MXU matmul, f32 accumulate, f32 bias add)
    x = x_ref[...].astype(jnp.bfloat16)
    h1 = jnp.dot(x, w1_ref[...].astype(jnp.bfloat16),
                 preferred_element_type=jnp.float32)
    h1 = jnp.maximum(h1 + b1_ref[...], 0.0)
    # Dropout(p) -> identity (eval mode)

    # Layer 2: Linear + ReLU
    h2 = jnp.dot(h1.astype(jnp.bfloat16), w2_ref[...].astype(jnp.bfloat16),
                 preferred_element_type=jnp.float32)
    h2 = jnp.maximum(h2 + b2_ref[...], 0.0)
    # Dropout(p) -> identity (eval mode)

    # Layer 3: Linear (logits). Output block is (block_b, n_class) — unpadded.
    out = jnp.dot(h2.astype(jnp.bfloat16), w3_ref[...].astype(jnp.bfloat16),
                  preferred_element_type=jnp.float32)
    o_ref[...] = (out + b3_ref[...]).astype(o_ref.dtype)


@functools.partial(jax.jit, static_argnames=("block_b_cap",))
def classifier_forward(x, params, *, block_b_cap=1024):
    """Runs the 3-layer MLP forward pass as a single fused Pallas kernel.

    x: (B, n_features) float32 (any B; no padding / slicing in the wrapper).
    params: dict with w1 (F, 2H), b1 (1, 2H), w2 (2H, H), b2 (1, H),
            w3 (H, C), b3 (1, C).
    Returns (B, C) logits.
    """
    B, F = x.shape
    w1, b1 = params["w1"], params["b1"]
    w2, b2 = params["w2"], params["b2"]
    w3, b3 = params["w3"], params["b3"]
    H2 = w1.shape[1]
    H = w2.shape[1]
    C = w3.shape[1]

    assert block_b_cap % 8 == 0, "block_b_cap must be a multiple of 8"

    # ---- Batch tiling ----
    # B <= cap: a single full-extent batch block (valid for any B, no padding,
    #           no ragged reads).
    # B  > cap: fixed block of `block_b_cap` rows (multiple of 8); grid is
    #           cdiv(B, block_b) and Pallas clips the ragged last block.
    #           Multiple blocks also let the "parallel" axis shard across
    #           TensorCores on multi-core parts (v7x).
    if B <= block_b_cap:
        block_b = B
    else:
        block_b = block_b_cap
    grid = (pl.cdiv(B, block_b),)

    # Grid-invariant operands (weights/biases): constant index_map, so the
    # pipeline keeps them resident in VMEM; only x / out move per grid step.
    invariant = lambda shape: pl.BlockSpec(shape, lambda i: (0, 0))

    out = pl.pallas_call(
        _mlp_kernel,
        out_shape=jax.ShapeDtypeStruct((B, C), x.dtype),
        grid_spec=pl.GridSpec(
            grid=grid,
            in_specs=[
                pl.BlockSpec((block_b, F), lambda i: (i, 0)),  # x: tiled batch
                invariant((F, H2)),                            # w1
                invariant((1, H2)),                            # b1
                invariant((H2, H)),                            # w2
                invariant((1, H)),                             # b2
                invariant((H, C)),                             # w3
                invariant((1, C)),                             # b3
            ],
            out_specs=pl.BlockSpec((block_b, C), lambda i: (i, 0)),
        ),
        compiler_params=pltpu.CompilerParams(
            dimension_semantics=("parallel",),
        ),
    )(x, w1, b1, w2, b2, w3, b3)

    return out


def init_params(key, n_features, n_class=2, n_hidden=32, dtype=jnp.float32):
    """Deterministic synthetic parameter init (PyTorch-like uniform fan-in)."""
    ks = jax.random.split(key, 6)

    def linear(kw, kb, fan_in, fan_out):
        bound = 1.0 / jnp.sqrt(jnp.asarray(fan_in, dtype))
        w = jax.random.uniform(kw, (fan_in, fan_out), dtype, -bound, bound)
        b = jax.random.uniform(kb, (1, fan_out), dtype, -bound, bound)
        return w, b

    w1, b1 = linear(ks[0], ks[1], n_features, n_hidden * 2)
    w2, b2 = linear(ks[2], ks[3], n_hidden * 2, n_hidden)
    w3, b3 = linear(ks[4], ks[5], n_hidden, n_class)
    return {"w1": w1, "b1": b1, "w2": w2, "b2": b2, "w3": w3, "b3": b3}


def reference_forward(x, params):
    """Pure-JAX f32 reference of the same eval-mode forward pass."""
    h1 = jnp.maximum(x @ params["w1"] + params["b1"], 0.0)
    h2 = jnp.maximum(h1 @ params["w2"] + params["b2"], 0.0)
    return h2 @ params["w3"] + params["b3"]


if __name__ == "__main__":
    key = jax.random.PRNGKey(0)
    k_x, k_p = jax.random.split(key)

    batch = 16
    n_features = 16
    n_hidden = 32
    n_class = 2

    x = jax.random.normal(k_x, (batch, n_features), jnp.float32)
    params = init_params(k_p, n_features, n_class=n_class, n_hidden=n_hidden)

    # bf16 matmul inputs (f32 accumulate) -> loosened tolerance vs f32 ref.
    TOL = dict(atol=5e-2, rtol=5e-2)

    out = jax.block_until_ready(classifier_forward(x, params))
    ref = reference_forward(x, params)
    assert out.shape == (batch, n_class), out.shape
    assert jnp.allclose(out, ref, **TOL), "mismatch vs reference (B=16)"

    # Non-multiple-of-8 batch: single full-extent block, no padding needed.
    x2 = jax.random.normal(k_x, (13, n_features), jnp.float32)
    out2 = jax.block_until_ready(classifier_forward(x2, params))
    assert out2.shape == (13, n_class), out2.shape
    assert jnp.allclose(out2, reference_forward(x2, params), **TOL), \
        "mismatch vs reference (B=13)"

    # Exercise the multi-block + ragged-last-block path with a tiny cap:
    # B=20, block_b=8 -> grid=3, last block has 4 valid rows (writes clipped).
    x3 = jax.random.normal(k_x, (20, n_features), jnp.float32)
    out3 = jax.block_until_ready(classifier_forward(x3, params, block_b_cap=8))
    assert out3.shape == (20, n_class), out3.shape
    assert jnp.allclose(out3, reference_forward(x3, params), **TOL), \
        "mismatch vs reference (B=20, tiled)"

    print("KERNEL_OK")
</pallas_src>

<mosaic_0001>
module attributes {stable_mosaic.version = 11 : i64} {
  func.func @_mlp_kernel(%arg0: i32, %arg1: memref<16x16xf32, #tpu.memory_space<vmem>>, %arg2: memref<16x64xf32, #tpu.memory_space<vmem>>, %arg3: memref<1x64xf32, #tpu.memory_space<vmem>>, %arg4: memref<64x32xf32, #tpu.memory_space<vmem>>, %arg5: memref<1x32xf32, #tpu.memory_space<vmem>>, %arg6: memref<32x2xf32, #tpu.memory_space<vmem>>, %arg7: memref<1x2xf32, #tpu.memory_space<vmem>>, %arg8: memref<16x2xf32, #tpu.memory_space<vmem>>) attributes {dimension_semantics = [#tpu.dimension_semantics<parallel>], iteration_bounds = array<i64: 1>, scalar_prefetch = 0 : i64, scratch_operands = 0 : i64, tpu.core_type = #tpu.core_type<tc>, window_params = [{transform_indices = @transform_0, window_bounds = array<i64: 16, 16>}, {pipeline_mode = #tpu.pipeline_mode<synchronous>, transform_indices = @transform_1, window_bounds = array<i64: 16, 64>}, {pipeline_mode = #tpu.pipeline_mode<synchronous>, transform_indices = @transform_2, window_bounds = array<i64: 1, 64>}, {pipeline_mode = #tpu.pipeline_mode<synchronous>, transform_indices = @transform_3, window_bounds = array<i64: 64, 32>}, {pipeline_mode = #tpu.pipeline_mode<synchronous>, transform_indices = @transform_4, window_bounds = array<i64: 1, 32>}, {pipeline_mode = #tpu.pipeline_mode<synchronous>, transform_indices = @transform_5, window_bounds = array<i64: 32, 2>}, {pipeline_mode = #tpu.pipeline_mode<synchronous>, transform_indices = @transform_6, window_bounds = array<i64: 1, 2>}, {transform_indices = @transform_7, window_bounds = array<i64: 16, 2>}]} {
    %c0 = arith.constant 0 : index
    %c0_0 = arith.constant 0 : index
    %0 = vector.load %arg1[%c0, %c0_0] : memref<16x16xf32, #tpu.memory_space<vmem>>, vector<16x16xf32>
    %1 = arith.truncf %0 : vector<16x16xf32> to vector<16x16xbf16>
    %c0_1 = arith.constant 0 : index
    %c0_2 = arith.constant 0 : index
    %2 = vector.load %arg2[%c0_1, %c0_2] : memref<16x64xf32, #tpu.memory_space<vmem>>, vector<16x64xf32>
    %3 = arith.truncf %2 : vector<16x64xf32> to vector<16x64xbf16>
    %cst = arith.constant dense<0.000000e+00> : vector<16x64xf32>
    %4 = tpu.matmul %1, %3, %cst {dimension_numbers = #tpu.dot_dimension_numbers<[1], [0], [0], [1], [0, 0, 1, 1], [], []>} : vector<16x16xbf16>, vector<16x64xbf16>, vector<16x64xf32> -> vector<16x64xf32>
    %c0_3 = arith.constant 0 : index
    %c0_4 = arith.constant 0 : index
    %5 = vector.load %arg3[%c0_3, %c0_4] : memref<1x64xf32, #tpu.memory_space<vmem>>, vector<1x64xf32>
    %6 = vector.broadcast %5 : vector<1x64xf32> to vector<16x64xf32>
    %7 = arith.addf %4, %6 : vector<16x64xf32>
    %cst_5 = arith.constant 0.000000e+00 : f32
    %8 = vector.broadcast %cst_5 : f32 to vector<16x64xf32>
    %9 = arith.maximumf %7, %8 : vector<16x64xf32>
    %10 = arith.truncf %9 : vector<16x64xf32> to vector<16x64xbf16>
    %c0_6 = arith.constant 0 : index
    %c0_7 = arith.constant 0 : index
    %11 = vector.load %arg4[%c0_6, %c0_7] : memref<64x32xf32, #tpu.memory_space<vmem>>, vector<64x32xf32>
    %12 = arith.truncf %11 : vector<64x32xf32> to vector<64x32xbf16>
    %cst_8 = arith.constant dense<0.000000e+00> : vector<16x32xf32>
    %13 = tpu.matmul %10, %12, %cst_8 {dimension_numbers = #tpu.dot_dimension_numbers<[1], [0], [0], [1], [0, 0, 1, 1], [], []>} : vector<16x64xbf16>, vector<64x32xbf16>, vector<16x32xf32> -> vector<16x32xf32>
    %c0_9 = arith.constant 0 : index
    %c0_10 = arith.constant 0 : index
    %14 = vector.load %arg5[%c0_9, %c0_10] : memref<1x32xf32, #tpu.memory_space<vmem>>, vector<1x32xf32>
    %15 = vector.broadcast %14 : vector<1x32xf32> to vector<16x32xf32>
    %16 = arith.addf %13, %15 : vector<16x32xf32>
    %cst_11 = arith.constant 0.000000e+00 : f32
    %17 = vector.broadcast %cst_11 : f32 to vector<16x32xf32>
    %18 = arith.maximumf %16, %17 : vector<16x32xf32>
    %19 = arith.truncf %18 : vector<16x32xf32> to vector<16x32xbf16>
    %c0_12 = arith.constant 0 : index
    %c0_13 = arith.constant 0 : index
    %20 = vector.load %arg6[%c0_12, %c0_13] : memref<32x2xf32, #tpu.memory_space<vmem>>, vector<32x2xf32>
    %21 = arith.truncf %20 : vector<32x2xf32> to vector<32x2xbf16>
    %cst_14 = arith.constant dense<0.000000e+00> : vector<16x2xf32>
    %22 = tpu.matmul %19, %21, %cst_14 {dimension_numbers = #tpu.dot_dimension_numbers<[1], [0], [0], [1], [0, 0, 1, 1], [], []>} : vector<16x32xbf16>, vector<32x2xbf16>, vector<16x2xf32> -> vector<16x2xf32>
    %c0_15 = arith.constant 0 : index
    %c0_16 = arith.constant 0 : index
    %23 = vector.load %arg7[%c0_15, %c0_16] : memref<1x2xf32, #tpu.memory_space<vmem>>, vector<1x2xf32>
    %24 = vector.broadcast %23 : vector<1x2xf32> to vector<16x2xf32>
    %25 = arith.addf %22, %24 : vector<16x2xf32>
    %c0_17 = arith.constant 0 : index
    %c0_18 = arith.constant 0 : index
    %26 = vector.load %arg8[%c0_17, %c0_18] : memref<16x2xf32, #tpu.memory_space<vmem>>, vector<16x2xf32>
    tpu.vector_store %arg8[%c0_17, %c0_18], %25 {strides = array<i32>} : memref<16x2xf32, #tpu.memory_space<vmem>>, vector<16x2xf32>,
    return
  }
  func.func @transform_0(%arg0: i32) -> (i32, i32) {
    %c0_i32 = arith.constant 0 : i32
    %c0_i32_0 = arith.constant 0 : i32
    return %arg0, %c0_i32 : i32, i32
  }
  func.func @transform_1(%arg0: i32) -> (i32, i32) {
    %c0_i32 = arith.constant 0 : i32
    %c0_i32_0 = arith.constant 0 : i32
    %c0_i32_1 = arith.constant 0 : i32
    return %c0_i32, %c0_i32_0 : i32, i32
  }
  func.func @transform_2(%arg0: i32) -> (i32, i32) {
    %c0_i32 = arith.constant 0 : i32
    %c0_i32_0 = arith.constant 0 : i32
    %c0_i32_1 = arith.constant 0 : i32
    return %c0_i32, %c0_i32_0 : i32, i32
  }
  func.func @transform_3(%arg0: i32) -> (i32, i32) {
    %c0_i32 = arith.constant 0 : i32
    %c0_i32_0 = arith.constant 0 : i32
    %c0_i32_1 = arith.constant 0 : i32
    return %c0_i32, %c0_i32_0 : i32, i32
  }
  func.func @transform_4(%arg0: i32) -> (i32, i32) {
    %c0_i32 = arith.constant 0 : i32
    %c0_i32_0 = arith.constant 0 : i32
    %c0_i32_1 = arith.constant 0 : i32
    return %c0_i32, %c0_i32_0 : i32, i32
  }
  func.func @transform_5(%arg0: i32) -> (i32, i32) {
    %c0_i32 = arith.constant 0 : i32
    %c0_i32_0 = arith.constant 0 : i32
    %c0_i32_1 = arith.constant 0 : i32
    return %c0_i32, %c0_i32_0 : i32, i32
  }
  func.func @transform_6(%arg0: i32) -> (i32, i32) {
    %c0_i32 = arith.constant 0 : i32
    %c0_i32_0 = arith.constant 0 : i32
    %c0_i32_1 = arith.constant 0 : i32
    return %c0_i32, %c0_i32_0 : i32, i32
  }
  func.func @transform_7(%arg0: i32) -> (i32, i32) {
    %c0_i32 = arith.constant 0 : i32
    %c0_i32_0 = arith.constant 0 : i32
    return %arg0, %c0_i32 : i32, i32
  }
}

</mosaic_0001>

<llo_original>
// kernel: classifier_forward.1
$region0: #{classifier_forward.1}
  #allocation0 [shape = 'u32[]', space=smem, size = 0x4, offset = 0x4, fixed_abs, tag = 'smem constant byte address 0x4 - core index']
  #allocation1 [shape = 'u32[144,128]{1,0:T(1,128)}', space=vmem, size = 0x12000, scoped, tag = 'internal scratch']
  %s0 = inlined_call_operand.vmem [shape: f32[16,16], index: 0, kind: input, shape index: {}]
  %s1 = inlined_call_operand.vmem [shape: f32[16,64], index: 1, kind: input, shape index: {}]
  %s2 = inlined_call_operand.vmem [shape: f32[1,64], index: 2, kind: input, shape index: {}]
  %s3 = inlined_call_operand.vmem [shape: f32[64,32], index: 3, kind: input, shape index: {}]
  %s4 = inlined_call_operand.vmem [shape: f32[1,32], index: 4, kind: input, shape index: {}]
  %s5 = inlined_call_operand.vmem [shape: f32[32,2], index: 5, kind: input, shape index: {}]
  %s6 = inlined_call_operand.vmem [shape: f32[1,2], index: 6, kind: input, shape index: {}]
  %s7 = inlined_call_operand.vmem [shape: f32[16,2], index: 7, kind: output, shape index: {}]
  %s8 = sld [smem:[#allocation0]]
  $region38: #{classifier_forward.1} parent=0
    _
  %s10 = ssub.s32 1, %s8
  %s11 = scalar_select 0, %s10, %s8
  // Predicated region
  $region2: #{classifier_forward.1} parent=0 // pred_check
    _
  $region3: #{classifier_forward.1} parent=0 // pred_check_branch
    %13 = sbr.rel (0) target = $region5
  $region4: #{classifier_forward.1} parent=0 // pred_region
    _
  $region5: #{classifier_forward.1} parent=0 // pred_fallthru
    _
  // Predicated region
  $region6: #{classifier_forward.1} parent=0 // pred_check
    _
  $region7: #{classifier_forward.1} parent=0 // pred_check_branch
    %15 = sbr.rel (0) target = $region9
  $region8: #{classifier_forward.1} parent=0 // pred_region
    _
  $region9: #{classifier_forward.1} parent=0 // pred_fallthru
    _
  // Predicated region
  $region10: #{classifier_forward.1} parent=0 // pred_check
    _
  $region11: #{classifier_forward.1} parent=0 // pred_check_branch
    %17 = sbr.rel (0) target = $region13
  $region12: #{classifier_forward.1} parent=0 // pred_region
    _
  $region13: #{classifier_forward.1} parent=0 // pred_fallthru
    _
  // Predicated region
  $region14: #{classifier_forward.1} parent=0 // pred_check
    _
  $region15: #{classifier_forward.1} parent=0 // pred_check_branch
    %19 = sbr.rel (0) target = $region17
  $region16: #{classifier_forward.1} parent=0 // pred_region
    _
  $region17: #{classifier_forward.1} parent=0 // pred_fallthru
    _
  // Predicated region
  $region18: #{classifier_forward.1} parent=0 // pred_check
    _
  $region19: #{classifier_forward.1} parent=0 // pred_check_branch
    %21 = sbr.rel (0) target = $region21
  $region20: #{classifier_forward.1} parent=0 // pred_region
    _
  $region21: #{classifier_forward.1} parent=0 // pred_fallthru
    _
  // Predicated region
  $region22: #{classifier_forward.1} parent=0 // pred_check
    _
  $region23: #{classifier_forward.1} parent=0 // pred_check_branch
    %23 = sbr.rel (0) target = $region25
  $region24: #{classifier_forward.1} parent=0 // pred_region
    _
  $region25: #{classifier_forward.1} parent=0 // pred_fallthru
    _
  // Predicated region
  $region26: #{classifier_forward.1} parent=0 // pred_check
    _
  $region27: #{classifier_forward.1} parent=0 // pred_check_branch
    %25 = sbr.rel (0) target = $region29
  $region28: #{classifier_forward.1} parent=0 // pred_region
    _
  $region29: #{classifier_forward.1} parent=0 // pred_fallthru
    _
  %v27 = vld [vmem:[%s0] sm:$0xff]
  %v28 = vld [vmem:[%s0 + $0x8] sm:$0xff]
  %v29 = vpack.c.bf16 %v28, %v27
  %v30 = vld [vmem:[%s1] sm:$0xff]
  %v31 = vld [vmem:[%s1 + $0x8] sm:$0xff]
  %v32 = vpack.c.bf16 %v31, %v30
  %v33 = vld [vmem:[%s2] sm:$0x1]
  %v35 = vlaneseq
  %v36 = vshrl.u32 %v35, 7
  %v37 = vsub.s32 0, %v36
  %v38 = vrot.slane %v33, %v37
  %vm40 = vcmask 130048
  %v42 = vsel %vm40, %v29, 0
  %44 = vmatprep.subr.bf16.mxu0 0
  %45 = vmatpush1.bf16.msra.mxu0 %v32
  %46 = vmatprep.subr.bf16.mxu0 0
  %47 = vmatpush1.bf16.msra.mxu0 0
  %48 = vmatprep.subr.bf16.mxu0 0
  %49 = vmatpush1.bf16.msra.mxu0 0
  %50 = vmatprep.subr.bf16.mxu0 0
  %51 = vmatpush1.bf16.msra.mxu0 0
  %52 = vmatprep.subr.bf16.mxu0 0
  %53 = vmatpush1.bf16.msra.mxu0 0
  %54 = vmatprep.subr.bf16.mxu0 0
  %55 = vmatpush1.bf16.msra.mxu0 0
  %56 = vmatprep.subr.bf16.mxu0 0
  %57 = vmatpush1.bf16.msra.mxu0 0
  %58 = vmatprep.subr.bf16.mxu0 0
  %59 = vmatpush1.bf16.msra.mxu0 0
  %60 = vmatprep.subr.bf16.mxu0 0
  %61 = vmatpush1.bf16.msra.mxu0 0
  %62 = vmatprep.subr.bf16.mxu0 0
  %63 = vmatpush1.bf16.msra.mxu0 0
  %64 = vmatprep.subr.bf16.mxu0 0
  %65 = vmatpush1.bf16.msra.mxu0 0
  %66 = vmatprep.subr.bf16.mxu0 0
  %67 = vmatpush1.bf16.msra.mxu0 0
  %68 = vmatprep.subr.bf16.mxu0 0
  %69 = vmatpush1.bf16.msra.mxu0 0
  %70 = vmatprep.subr.bf16.mxu0 0
  %71 = vmatpush1.bf16.msra.mxu0 0
  %72 = vmatprep.subr.bf16.mxu0 0
  %73 = vmatpush1.bf16.msra.mxu0 0
  %74 = vmatprep.subr.bf16.mxu0 0
  %75 = vmatpush1.bf16.msra.mxu0 0
  %76 = vmatprep.mubr.bf16.mxu0 0
  %77 = vmatmul.mubr.bf16.gmra.mrb[0].mxu0 %v42
  %v78 = vpop.f32.mrb[0].mxu0
  %v79 = vadd.f32 %v38, %v78
  %v80 = vpop.f32.mrb[0].mxu0
  %v81 = vpop.f32.mrb[0].mxu0
  %v82 = vadd.f32 %v38, %v81
  %v83 = vpop.f32.mrb[0].mxu0
  %84 = vdwg.mxu0
  %v85 = vmax.f32 %v79, 0.0
  %v86 = vmax.f32 %v82, 0.0
  %v87 = vpack.c.bf16 %v86, %v85
  %v88 = vld [vmem:[%s3] sm:$0xff]
  %v89 = vld [vmem:[%s3 + $0x8] sm:$0xff]
  %v90 = vld [vmem:[%s3 + $0x10] sm:$0xff]
  %v91 = vld [vmem:[%s3 + $0x18] sm:$0xff]
  %v92 = vld [vmem:[%s3 + $0x20] sm:$0xff]
  %v93 = vld [vmem:[%s3 + $0x28] sm:$0xff]
  %v94 = vld [vmem:[%s3 + $0x30] sm:$0xff]
  %v95 = vld [vmem:[%s3 + $0x38] sm:$0xff]
  %v96 = vpack.c.bf16 %v89, %v88
  %v97 = vpack.c.bf16 %v91, %v90
  %v98 = vpack.c.bf16 %v93, %v92
  %v99 = vpack.c.bf16 %v95, %v94
  %v100 = vld [vmem:[%s4] sm:$0x1]
  %v102 = vlaneseq
  %v103 = vshrl.u32 %v102, 7
  %v104 = vsub.s32 0, %v103
  %v105 = vrot.slane %v100, %v104
  %vm107 = vcmask 523264
  %v109 = vsel %vm107, %v87, 0
  %111 = vmatprep.subr.bf16.mxu0 0
  %112 = vmatpush1.bf16.msra.mxu0 %v96
  %113 = vmatprep.subr.bf16.mxu0 0
  %114 = vmatpush1.bf16.msra.mxu0 %v97
  %115 = vmatprep.subr.bf16.mxu0 0
  %116 = vmatpush1.bf16.msra.mxu0 %v98
  %117 = vmatprep.subr.bf16.mxu0 0
  %118 = vmatpush1.bf16.msra.mxu0 %v99
  %119 = vmatprep.subr.bf16.mxu0 0
  %120 = vmatpush1.bf16.msra.mxu0 0
  %121 = vmatprep.subr.bf16.mxu0 0
  %122 = vmatpush1.bf16.msra.mxu0 0
  %123 = vmatprep.subr.bf16.mxu0 0
  %124 = vmatpush1.bf16.msra.mxu0 0
  %125 = vmatprep.subr.bf16.mxu0 0
  %126 = vmatpush1.bf16.msra.mxu0 0
  %127 = vmatprep.subr.bf16.mxu0 0
  %128 = vmatpush1.bf16.msra.mxu0 0
  %129 = vmatprep.subr.bf16.mxu0 0
  %130 = vmatpush1.bf16.msra.mxu0 0
  %131 = vmatprep.subr.bf16.mxu0 0
  %132 = vmatpush1.bf16.msra.mxu0 0
  %133 = vmatprep.subr.bf16.mxu0 0
  %134 = vmatpush1.bf16.msra.mxu0 0
  %135 = vmatprep.subr.bf16.mxu0 0
  %136 = vmatpush1.bf16.msra.mxu0 0
  %137 = vmatprep.subr.bf16.mxu0 0
  %138 = vmatpush1.bf16.msra.mxu0 0
  %139 = vmatprep.subr.bf16.mxu0 0
  %140 = vmatpush1.bf16.msra.mxu0 0
  %141 = vmatprep.subr.bf16.mxu0 0
  %142 = vmatpush1.bf16.msra.mxu0 0
  %143 = vmatprep.mubr.bf16.mxu0 0
  %144 = vmatmul.mubr.bf16.gmra.mrb[0].mxu0 %v109
  %v145 = vpop.f32.mrb[0].mxu0
  %v146 = vadd.f32 %v105, %v145
  %v147 = vpop.f32.mrb[0].mxu0
  %v148 = vpop.f32.mrb[0].mxu0
  %v149 = vadd.f32 %v105, %v148
  %v150 = vpop.f32.mrb[0].mxu0
  %151 = vdwg.mxu0
  %v152 = vmax.f32 %v146, 0.0
  %v153 = vmax.f32 %v149, 0.0
  %v154 = vpack.c.bf16 %v153, %v152
  %v155 = vld [vmem:[%s5] sm:$0xff]
  %v156 = vld [vmem:[%s5 + $0x8] sm:$0xff]
  %v157 = vld [vmem:[%s5 + $0x10] sm:$0xff]
  %v158 = vld [vmem:[%s5 + $0x18] sm:$0xff]
  %v159 = vpack.c.bf16 %v156, %v155
  %v160 = vpack.c.bf16 %v158, %v157
  %v161 = vld [vmem:[%s6] sm:$0x1]
  %v163 = vlaneseq
  %v164 = vshrl.u32 %v163, 7
  %v165 = vsub.s32 0, %v164
  %v166 = vrot.slane %v161, %v165
  %vm168 = vcmask 261120
  %v170 = vsel %vm168, %v154, 0
  %172 = vmatprep.subr.bf16.mxu0 0
  %173 = vmatpush1.bf16.msra.mxu0 %v159
  %174 = vmatprep.subr.bf16.mxu0 0
  %175 = vmatpush1.bf16.msra.mxu0 %v160
  %176 = vmatprep.subr.bf16.mxu0 0
  %177 = vmatpush1.bf16.msra.mxu0 0
  %178 = vmatprep.subr.bf16.mxu0 0
  %179 = vmatpush1.bf16.msra.mxu0 0
  %180 = vmatprep.subr.bf16.mxu0 0
  %181 = vmatpush1.bf16.msra.mxu0 0
  %182 = vmatprep.subr.bf16.mxu0 0
  %183 = vmatpush1.bf16.msra.mxu0 0
  %184 = vmatprep.subr.bf16.mxu0 0
  %185 = vmatpush1.bf16.msra.mxu0 0
  %186 = vmatprep.subr.bf16.mxu0 0
  %187 = vmatpush1.bf16.msra.mxu0 0
  %188 = vmatprep.subr.bf16.mxu0 0
  %189 = vmatpush1.bf16.msra.mxu0 0
  %190 = vmatprep.subr.bf16.mxu0 0
  %191 = vmatpush1.bf16.msra.mxu0 0
  %192 = vmatprep.subr.bf16.mxu0 0
  %193 = vmatpush1.bf16.msra.mxu0 0
  %194 = vmatprep.subr.bf16.mxu0 0
  %195 = vmatpush1.bf16.msra.mxu0 0
  %196 = vmatprep.subr.bf16.mxu0 0
  %197 = vmatpush1.bf16.msra.mxu0 0
  %198 = vmatprep.subr.bf16.mxu0 0
  %199 = vmatpush1.bf16.msra.mxu0 0
  %200 = vmatprep.subr.bf16.mxu0 0
  %201 = vmatpush1.bf16.msra.mxu0 0
  %202 = vmatprep.subr.bf16.mxu0 0
  %203 = vmatpush1.bf16.msra.mxu0 0
  %204 = vmatprep.mubr.bf16.mxu0 0
  %205 = vmatmul.mubr.bf16.gmra.mrb[0].mxu0 %v170
  %v206 = vpop.f32.mrb[0].mxu0
  %v207 = vadd.f32 %v166, %v206
  %v208 = vpop.f32.mrb[0].mxu0
  %v209 = vpop.f32.mrb[0].mxu0
  %v210 = vadd.f32 %v166, %v209
  %v211 = vpop.f32.mrb[0].mxu0
  %212 = vdwg.mxu0
  %vm213 = vcmask 15360
  %214 = vst.msk [vmem:[%s7] sm:$0xff] %vm213, %v207
  %215 = vst.msk [vmem:[%s7 + $0x8] sm:$0xff] %vm213, %v210
  // Predicated region
  $region30: #{classifier_forward.1} parent=0 // pred_check
    _
  $region31: #{classifier_forward.1} parent=0 // pred_check_branch
    %217 = sbr.rel (0) target = $region33
  $region32: #{classifier_forward.1} parent=0 // pred_region
    _
  $region33: #{classifier_forward.1} parent=0 // pred_fallthru
    _
  // Predicated region
  $region34: #{classifier_forward.1} parent=0 // pred_check
    _
  $region35: #{classifier_forward.1} parent=0 // pred_check_branch
    %219 = sbr.rel (0) target = $region37
  $region36: #{classifier_forward.1} parent=0 // pred_region
    _
  $region37: #{classifier_forward.1} parent=0 // pred_fallthru
    _

</llo_original>
